<compile_context>
chip_gen: v6e
topology: v6e:2x2x1
jax: 0.10.0
libtpu: 0.0.40
codegen_flags: <defaults>
</compile_context>

<pallas_src>
import functools

import jax
import jax.numpy as jnp
from jax.experimental import pallas as pl
from jax.experimental.pallas import tpu as pltpu

LANE = 128                 # TPU lane width: every channel axis is padded to this
KSIZE = 3                  # Conv1d kernel size used by all encoders / decoders
TPAD = (KSIZE - 1) // 2    # temporal "same" padding


def _round_up(x, m):
    return ((x + m - 1) // m) * m


# ----------------------------------------------------------------------------
# Fused Conv1d(k=3) + ReLU + Conv1d(k=3) body (shared by encoders and decoder)
# ----------------------------------------------------------------------------
def _conv_relu_conv(x, w1_ref, b1_ref, w2_ref, b2_ref, hbuf, t_len):
    """x: (t_len + 2*TPAD, Cpad) value.  Returns (t_len, Opad) f32."""
    cpad = x.shape[1]
    hpad = w1_ref.shape[1]

    # conv1: K accumulated matmuls over shifted time windows (contraction = 128)
    acc = jnp.dot(x[0:t_len, :], w1_ref[0:cpad, :],
                  preferred_element_type=jnp.float32)
    acc = acc + jnp.dot(x[1:1 + t_len, :], w1_ref[cpad:2 * cpad, :],
                        preferred_element_type=jnp.float32)
    acc = acc + jnp.dot(x[2:2 + t_len, :], w1_ref[2 * cpad:3 * cpad, :],
                        preferred_element_type=jnp.float32)
    h = jnp.maximum(acc + b1_ref[...], 0.0)                    # (t_len, Hpad)

    # stage the hidden activation (with zero halo rows) in VMEM scratch
    hbuf[0:TPAD, :] = jnp.zeros((TPAD, hpad), jnp.float32)
    hbuf[TPAD:TPAD + t_len, :] = h
    hbuf[TPAD + t_len:TPAD + t_len + TPAD, :] = jnp.zeros((TPAD, hpad), jnp.float32)

    # conv2: same shifted-window accumulation over the scratch buffer
    z = jnp.dot(hbuf[0:t_len, :], w2_ref[0:hpad, :],
                preferred_element_type=jnp.float32)
    z = z + jnp.dot(hbuf[1:1 + t_len, :], w2_ref[hpad:2 * hpad, :],
                    preferred_element_type=jnp.float32)
    z = z + jnp.dot(hbuf[2:2 + t_len, :], w2_ref[2 * hpad:3 * hpad, :],
                    preferred_element_type=jnp.float32)
    return z + b2_ref[...]                                     # (t_len, Opad)


# ----------------------------------------------------------------------------
# Kernel 1: fused encoder (optionally with global average time-pooling)
# ----------------------------------------------------------------------------
def _conv_stack_kernel(x_ref, w1_ref, b1_ref, w2_ref, b2_ref, out_ref, hbuf,
                       *, t_len, pool_time):
    x = x_ref[0]                                               # (t_len+2, Cpad)
    z = _conv_relu_conv(x, w1_ref, b1_ref, w2_ref, b2_ref, hbuf, t_len)
    if pool_time:
        out_ref[0] = jnp.sum(z, axis=0, keepdims=True) * (1.0 / t_len)   # (1, Opad)
    else:
        out_ref[0] = z                                                    # (t_len, Opad)


def fused_conv_stack(x_pad, layer, t_len, pool_time):
    B, tp, cpad = x_pad.shape
    hpad = layer['w1'].shape[1]
    opad = layer['w2'].shape[1]
    out_t = 1 if pool_time else t_len
    kern = functools.partial(_conv_stack_kernel, t_len=t_len, pool_time=pool_time)
    return pl.pallas_call(
        kern,
        out_shape=jax.ShapeDtypeStruct((B, out_t, opad), jnp.float32),
        grid=(B,),
        in_specs=[
            pl.BlockSpec((1, tp, cpad), lambda b: (b, 0, 0)),
            pl.BlockSpec((KSIZE * cpad, hpad), lambda b: (0, 0)),   # loop-invariant
            pl.BlockSpec((1, hpad), lambda b: (0, 0)),
            pl.BlockSpec((KSIZE * hpad, opad), lambda b: (0, 0)),
            pl.BlockSpec((1, opad), lambda b: (0, 0)),
        ],
        out_specs=pl.BlockSpec((1, out_t, opad), lambda b: (b, 0, 0)),
        scratch_shapes=[pltpu.VMEM((t_len + 2 * TPAD, hpad), jnp.float32)],
        compiler_params=pltpu.CompilerParams(dimension_semantics=("parallel",)),
    )(x_pad, layer['w1'], layer['b1'], layer['w2'], layer['b2'])


# ----------------------------------------------------------------------------
# Kernel 2: fused decoder + reconstruction-MSE partial sums
# ----------------------------------------------------------------------------
def _decoder_kernel(lat_ref, tgt_ref, w1_ref, b1_ref, w2_ref, b2_ref,
                    out_ref, loss_ref, hbuf, *, t_len):
    x = lat_ref[0]                                             # (t_len+2, Cpad)
    z = _conv_relu_conv(x, w1_ref, b1_ref, w2_ref, b2_ref, hbuf, t_len)
    out_ref[0] = z
    # target tile is already resident: fuse the squared-error partial sum.
    # padded lanes of both z and target are exactly zero -> contribute nothing.
    target = tgt_ref[0][TPAD:TPAD + t_len, :]
    diff = z - target
    loss_ref[0] = jnp.zeros((8, LANE), jnp.float32) + jnp.sum(diff * diff)


def fused_decoder(latent_pad, target_pad, layer, t_len):
    B, tp, cpad = latent_pad.shape
    hpad = layer['w1'].shape[1]
    opad = layer['w2'].shape[1]
    kern = functools.partial(_decoder_kernel, t_len=t_len)
    return pl.pallas_call(
        kern,
        out_shape=(jax.ShapeDtypeStruct((B, t_len, opad), jnp.float32),
                   jax.ShapeDtypeStruct((B, 8, LANE), jnp.float32)),
        grid=(B,),
        in_specs=[
            pl.BlockSpec((1, tp, cpad), lambda b: (b, 0, 0)),
            pl.BlockSpec((1, tp, opad), lambda b: (b, 0, 0)),       # target
            pl.BlockSpec((KSIZE * cpad, hpad), lambda b: (0, 0)),
            pl.BlockSpec((1, hpad), lambda b: (0, 0)),
            pl.BlockSpec((KSIZE * hpad, opad), lambda b: (0, 0)),
            pl.BlockSpec((1, opad), lambda b: (0, 0)),
        ],
        out_specs=(
            pl.BlockSpec((1, t_len, opad), lambda b: (b, 0, 0)),
            pl.BlockSpec((1, 8, LANE), lambda b: (b, 0, 0)),
        ),
        scratch_shapes=[pltpu.VMEM((t_len + 2 * TPAD, hpad), jnp.float32)],
        compiler_params=pltpu.CompilerParams(dimension_semantics=("parallel",)),
    )(latent_pad, target_pad, layer['w1'], layer['b1'], layer['w2'], layer['b2'])


# ----------------------------------------------------------------------------
# Kernel 3: vector quantizer (QuantizeEMAReset forward semantics), row-tiled
# ----------------------------------------------------------------------------
def _vq_kernel(z_ref, e_ref, esq_ref, zq_ref, loss_ref,
               *, n_codes, n_valid_rows, rows_per_block):
    blk = pl.program_id(0)
    z = z_ref[...]                                             # (R, Dpad)
    e = e_ref[...]                                             # (Kpad, Dpad), zero-padded
    kpad = e.shape[0]

    # d[n, j] = |e_j|^2 - 2 z_n . e_j   (|z_n|^2 is per-row constant for argmin)
    ze = jax.lax.dot_general(z, e, (((1,), (1,)), ((), ())),
                             preferred_element_type=jnp.float32)   # (R, Kpad)
    d = esq_ref[...] - 2.0 * ze
    code_iota = jax.lax.broadcasted_iota(jnp.int32, d.shape, 1)
    d = jnp.where(code_iota < n_codes, d, jnp.float32(1e30))       # mask padded codes

    # argmin with first-index tie-break, then one-hot gather via MXU matmul
    dmin = jnp.min(d, axis=1, keepdims=True)
    idx = jnp.min(jnp.where(d == dmin, code_iota, kpad), axis=1, keepdims=True)
    onehot = (code_iota == idx).astype(jnp.float32)
    zq = jnp.dot(onehot, e, preferred_element_type=jnp.float32)    # (R, Dpad)
    zq_ref[...] = zq

    # commitment-loss partial sum, masking padded rows of this block
    row_iota = jax.lax.broadcasted_iota(jnp.int32, z.shape, 0) + blk * rows_per_block
    valid = (row_iota < n_valid_rows).astype(jnp.float32)
    diff = (zq - z) * valid
    loss_ref[0] = jnp.zeros((8, LANE), jnp.float32) + jnp.sum(diff * diff)


def pallas_vq(z_flat, vq, latent_dim, block_rows_cap=512):
    n_rows, dpad = z_flat.shape
    codes, e_sq, n_codes = vq['codes'], vq['e_sq'], vq['n_codes']
    kpad = codes.shape[0]

    block_rows = min(block_rows_cap, _round_up(n_rows, 8))
    rows_padded = _round_up(n_rows, block_rows)
    z_in = (jnp.pad(z_flat, ((0, rows_padded - n_rows), (0, 0)))
            if rows_padded != n_rows else z_flat)
    grid = rows_padded // block_rows

    kern = functools.partial(_vq_kernel, n_codes=n_codes,
                             n_valid_rows=n_rows, rows_per_block=block_rows)
    zq, parts = pl.pallas_call(
        kern,
        out_shape=(jax.ShapeDtypeStruct((rows_padded, dpad), jnp.float32),
                   jax.ShapeDtypeStruct((grid, 8, LANE), jnp.float32)),
        grid=(grid,),
        in_specs=[
            pl.BlockSpec((block_rows, dpad), lambda i: (i, 0)),
            pl.BlockSpec((kpad, dpad), lambda i: (0, 0)),   # codebook resident
            pl.BlockSpec((1, kpad), lambda i: (0, 0)),      # precomputed |e|^2
        ],
        out_specs=(
            pl.BlockSpec((block_rows, dpad), lambda i: (i, 0)),
            pl.BlockSpec((1, 8, LANE), lambda i: (i, 0, 0)),
        ),
        compiler_params=pltpu.CompilerParams(dimension_semantics=("parallel",)),
    )(z_in, codes, e_sq)

    commit = jnp.sum(parts[:, 0, 0]) / (n_rows * latent_dim)
    return zq[:n_rows], commit


# ----------------------------------------------------------------------------
# Parameter construction: torch-layout weights + lane-padded packing (done once)
# ----------------------------------------------------------------------------
def init_params(key, nfeats, latent_dim, hidden, n_codes_content, n_codes_style):
    keys = jax.random.split(key, 14)
    ki = iter(keys)

    def conv(cin, cout):
        w = 0.1 * jax.random.normal(next(ki), (cout, cin, KSIZE), jnp.float32)
        b = 0.1 * jax.random.normal(next(ki), (cout,), jnp.float32)
        return w, b

    raw = {}
    raw['ce_w1'], raw['ce_b1'] = conv(nfeats, hidden)
    raw['ce_w2'], raw['ce_b2'] = conv(hidden, latent_dim)
    raw['se_w1'], raw['se_b1'] = conv(nfeats, hidden)
    raw['se_w2'], raw['se_b2'] = conv(hidden, latent_dim)
    raw['d_w1'], raw['d_b1'] = conv(2 * latent_dim, hidden)
    raw['d_w2'], raw['d_b2'] = conv(hidden, nfeats)
    raw['c_codes'] = jax.random.normal(next(ki), (n_codes_content, latent_dim), jnp.float32)
    raw['s_codes'] = jax.random.normal(next(ki), (n_codes_style, latent_dim), jnp.float32)

    def pack_conv(w, b):
        cout, cin, k = w.shape
        cin_p, cout_p = _round_up(cin, LANE), _round_up(cout, LANE)
        wt = jnp.transpose(w, (2, 1, 0))                       # (K, Cin, Cout)
        wt = jnp.pad(wt, ((0, 0), (0, cin_p - cin), (0, cout_p - cout)))
        return (wt.reshape(k * cin_p, cout_p),
                jnp.pad(b, (0, cout_p - cout)).reshape(1, cout_p))

    def pack_layer(w1, b1, w2, b2):
        pw1, pb1 = pack_conv(w1, b1)
        pw2, pb2 = pack_conv(w2, b2)
        return {'w1': pw1, 'b1': pb1, 'w2': pw2, 'b2': pb2}

    def pack_codes(e):
        n, d = e.shape
        kp, dp = _round_up(n, LANE), _round_up(d, LANE)
        ep = jnp.pad(e, ((0, kp - n), (0, dp - d)))
        return {'codes': ep, 'e_sq': jnp.sum(ep * ep, axis=1).reshape(1, kp), 'n_codes': n}

    params = {
        'content_enc': pack_layer(raw['ce_w1'], raw['ce_b1'], raw['ce_w2'], raw['ce_b2']),
        'style_enc': pack_layer(raw['se_w1'], raw['se_b1'], raw['se_w2'], raw['se_b2']),
        'dec': pack_layer(raw['d_w1'], raw['d_b1'], raw['d_w2'], raw['d_b2']),
        'content_vq': pack_codes(raw['c_codes']),
        'style_vq': pack_codes(raw['s_codes']),
        'latent_dim': latent_dim,
        'nfeats': nfeats,
    }
    return params, raw


# ----------------------------------------------------------------------------
# StyleVQVAE.forward
# ----------------------------------------------------------------------------
def style_vqvae_forward(params, batch, lambdas, modality='motion'):
    # TODO(synk): modality == 'neural' softplus head not implemented (unused for 'motion').
    x = batch[modality]                                        # (B, nfeats, T) NCL
    B, nfeats, T = x.shape
    latent_dim = params['latent_dim']

    # boundary transpose to channel-last + pad time halo and lanes (to 128)
    x_tc = jnp.transpose(x, (0, 2, 1)).astype(jnp.float32)
    x_pad = jnp.pad(x_tc, ((0, 0), (TPAD, TPAD), (0, LANE - nfeats)))  # (B, T+2, 128)

    # encoders (fused conv + ReLU + conv kernels)
    z_c = fused_conv_stack(x_pad, params['content_enc'], T, pool_time=False)  # (B, T, 128)
    z_s = fused_conv_stack(x_pad, params['style_enc'], T, pool_time=True)     # (B, 1, 128)
    # TODO(synk): the style encoder's length-1 latent is realized as global average
    # time-pooling (the original class is config-driven; length 1 is required for
    # the `latent_s.repeat(1, 1, T)` in StyleVQVAE.forward).

    # vector quantization (nearest code, straight-through output, commit MSE)
    zq_c_flat, commit_c = pallas_vq(z_c.reshape(B * T, LANE), params['content_vq'], latent_dim)
    zq_s_flat, commit_s = pallas_vq(z_s.reshape(B, LANE), params['style_vq'], latent_dim)
    zq_c = zq_c_flat.reshape(B, T, LANE)
    zq_s = zq_s_flat.reshape(B, 1, LANE)

    # latent = cat(content, style repeated over T), packed into the first 2*D lanes
    style_rep = jnp.broadcast_to(zq_s[:, :, :latent_dim], (B, T, latent_dim))
    latent = zq_c.at[:, :, latent_dim:2 * latent_dim].set(style_rep)          # (B, T, 128)
    latent_pad = jnp.pad(latent, ((0, 0), (TPAD, TPAD), (0, 0)))              # (B, T+2, 128)

    # decoder (fused conv + ReLU + conv with the recon-MSE partials fused in)
    out_tc, mse_parts = fused_decoder(latent_pad, x_pad, params['dec'], T)
    recons = jnp.sum(mse_parts[:, 0, 0]) / (B * T * nfeats)

    out = jnp.transpose(out_tc[:, :, :nfeats], (0, 2, 1))                     # back to NCL

    loss = {'recons': recons, 'commitment': commit_c + commit_s}
    total_loss = sum(lambdas[k] * v for k, v in loss.items())
    # NOTE: loss values stay on device (no .item()-style host syncs inside the forward).
    return out, total_loss, loss


# ----------------------------------------------------------------------------
# Pure-JAX reference (XLA) for numerical sanity checking
# ----------------------------------------------------------------------------
def _ref_conv1d(x, w, b):
    y = jax.lax.conv_general_dilated(x, w, window_strides=(1,),
                                     padding=((TPAD, TPAD),),
                                     dimension_numbers=('NCH', 'OIH', 'NCH'))
    return y + b[None, :, None]


def _ref_vq(z, codes):
    B, D, T = z.shape
    zf = jnp.transpose(z, (0, 2, 1)).reshape(-1, D)
    d = (jnp.sum(zf * zf, axis=1, keepdims=True) - 2.0 * zf @ codes.T
         + jnp.sum(codes * codes, axis=1)[None, :])
    idx = jnp.argmin(d, axis=1)
    zq = codes[idx]
    commit = jnp.mean((zq - zf) ** 2)
    return jnp.transpose(zq.reshape(B, T, D), (0, 2, 1)), commit


def reference_forward(raw, batch, lambdas):
    x = batch['motion']
    zc = _ref_conv1d(jnp.maximum(_ref_conv1d(x, raw['ce_w1'], raw['ce_b1']), 0.0),
                     raw['ce_w2'], raw['ce_b2'])
    zs = _ref_conv1d(jnp.maximum(_ref_conv1d(x, raw['se_w1'], raw['se_b1']), 0.0),
                     raw['se_w2'], raw['se_b2'])
    zs = jnp.mean(zs, axis=2, keepdims=True)
    lc, cc = _ref_vq(zc, raw['c_codes'])
    ls, cs = _ref_vq(zs, raw['s_codes'])
    latent = jnp.concatenate([lc, jnp.repeat(ls, lc.shape[-1], axis=2)], axis=1)
    out = _ref_conv1d(jnp.maximum(_ref_conv1d(latent, raw['d_w1'], raw['d_b1']), 0.0),
                      raw['d_w2'], raw['d_b2'])
    loss = {'recons': jnp.mean((out - x) ** 2), 'commitment': cc + cs}
    total = sum(lambdas[k] * v for k, v in loss.items())
    return out, total, loss


# ----------------------------------------------------------------------------
if __name__ == "__main__":
    key = jax.random.PRNGKey(0)
    B, nfeats, T = 2, 6, 16
    latent_dim, hidden = 8, 16
    lambdas = {'recons': 1.0, 'commitment': 0.02}

    kp, kx = jax.random.split(key)
    params, raw = init_params(kp, nfeats, latent_dim, hidden,
                              n_codes_content=64, n_codes_style=32)
    batch = {'motion': jax.random.normal(kx, (B, nfeats, T), jnp.float32)}

    out, total_loss, loss = style_vqvae_forward(params, batch, lambdas)
    jax.block_until_ready(out)
    jax.block_until_ready(total_loss)

    # host-side conversion of the loss scalars happens only here (outside the forward)
    loss_dict = {k: float(v) for k, v in loss.items()}
    assert out.shape == (B, nfeats, T)
    assert set(loss_dict) == {'recons', 'commitment'}

    # numerical sanity check against a pure-JAX/XLA reference
    ref_out, ref_total, _ = reference_forward(raw, batch, lambdas)
    assert jnp.allclose(out, ref_out, rtol=1e-3, atol=1e-3), "reconstruction mismatch"
    assert abs(float(total_loss) - float(ref_total)) < 1e-3, "total loss mismatch"

    print("KERNEL_OK")
</pallas_src>

<mosaic_0001>
module attributes {stable_mosaic.version = 11 : i64} {
  func.func @_conv_stack_kernel(%arg0: i32, %arg1: memref<1x18x128xf32, #tpu.memory_space<vmem>>, %arg2: memref<384x128xf32, #tpu.memory_space<vmem>>, %arg3: memref<1x128xf32, #tpu.memory_space<vmem>>, %arg4: memref<384x128xf32, #tpu.memory_space<vmem>>, %arg5: memref<1x128xf32, #tpu.memory_space<vmem>>, %arg6: memref<1x16x128xf32, #tpu.memory_space<vmem>>, %arg7: memref<18x128xf32, #tpu.memory_space<vmem>>) attributes {dimension_semantics = [#tpu.dimension_semantics<parallel>], iteration_bounds = array<i64: 2>, scalar_prefetch = 0 : i64, scratch_operands = 1 : i64, tpu.core_type = #tpu.core_type<tc>, window_params = [{transform_indices = @transform_0, window_bounds = array<i64: 1, 18, 128>}, {pipeline_mode = #tpu.pipeline_mode<synchronous>, transform_indices = @transform_1, window_bounds = array<i64: 384, 128>}, {pipeline_mode = #tpu.pipeline_mode<synchronous>, transform_indices = @transform_2, window_bounds = array<i64: 1, 128>}, {pipeline_mode = #tpu.pipeline_mode<synchronous>, transform_indices = @transform_3, window_bounds = array<i64: 384, 128>}, {pipeline_mode = #tpu.pipeline_mode<synchronous>, transform_indices = @transform_4, window_bounds = array<i64: 1, 128>}, {transform_indices = @transform_5, window_bounds = array<i64: 1, 16, 128>}]} {
    %c0 = arith.constant 0 : index
    %c0_0 = arith.constant 0 : index
    %c0_1 = arith.constant 0 : index
    %0 = vector.load %arg1[%c0, %c0_0, %c0_1] : memref<1x18x128xf32, #tpu.memory_space<vmem>>, vector<1x18x128xf32>
    %1 = vector.shape_cast %0 : vector<1x18x128xf32> to vector<18x128xf32>
    %2 = vector.extract_strided_slice %1 {offsets = [0, 0], sizes = [16, 128], strides = [1, 1]} : vector<18x128xf32> to vector<16x128xf32>
    %c0_2 = arith.constant 0 : index
    %c0_3 = arith.constant 0 : index
    %3 = vector.load %arg2[%c0_2, %c0_3] : memref<384x128xf32, #tpu.memory_space<vmem>>, vector<128x128xf32>
    %cst = arith.constant dense<0.000000e+00> : vector<16x128xf32>
    %4 = tpu.matmul %2, %3, %cst {dimension_numbers = #tpu.dot_dimension_numbers<[1], [0], [0], [1], [0, 0, 1, 1], [], []>} : vector<16x128xf32>, vector<128x128xf32>, vector<16x128xf32> -> vector<16x128xf32>
    %5 = vector.extract_strided_slice %1 {offsets = [1, 0], sizes = [16, 128], strides = [1, 1]} : vector<18x128xf32> to vector<16x128xf32>
    %c128 = arith.constant 128 : index
    %c0_4 = arith.constant 0 : index
    %6 = vector.load %arg2[%c128, %c0_4] : memref<384x128xf32, #tpu.memory_space<vmem>>, vector<128x128xf32>
    %cst_5 = arith.constant dense<0.000000e+00> : vector<16x128xf32>
    %7 = tpu.matmul %5, %6, %cst_5 {dimension_numbers = #tpu.dot_dimension_numbers<[1], [0], [0], [1], [0, 0, 1, 1], [], []>} : vector<16x128xf32>, vector<128x128xf32>, vector<16x128xf32> -> vector<16x128xf32>
    %8 = arith.addf %4, %7 : vector<16x128xf32>
    %9 = vector.extract_strided_slice %1 {offsets = [2, 0], sizes = [16, 128], strides = [1, 1]} : vector<18x128xf32> to vector<16x128xf32>
    %c256 = arith.constant 256 : index
    %c0_6 = arith.constant 0 : index
    %10 = vector.load %arg2[%c256, %c0_6] : memref<384x128xf32, #tpu.memory_space<vmem>>, vector<128x128xf32>
    %cst_7 = arith.constant dense<0.000000e+00> : vector<16x128xf32>
    %11 = tpu.matmul %9, %10, %cst_7 {dimension_numbers = #tpu.dot_dimension_numbers<[1], [0], [0], [1], [0, 0, 1, 1], [], []>} : vector<16x128xf32>, vector<128x128xf32>, vector<16x128xf32> -> vector<16x128xf32>
    %12 = arith.addf %8, %11 : vector<16x128xf32>
    %c0_8 = arith.constant 0 : index
    %c0_9 = arith.constant 0 : index
    %13 = vector.load %arg3[%c0_8, %c0_9] : memref<1x128xf32, #tpu.memory_space<vmem>>, vector<1x128xf32>
    %14 = vector.broadcast %13 : vector<1x128xf32> to vector<16x128xf32>
    %15 = arith.addf %12, %14 : vector<16x128xf32>
    %cst_10 = arith.constant 0.000000e+00 : f32
    %16 = vector.broadcast %cst_10 : f32 to vector<16x128xf32>
    %17 = arith.maximumf %15, %16 : vector<16x128xf32>
    %cst_11 = arith.constant 0.000000e+00 : f32
    %18 = vector.broadcast %cst_11 : f32 to vector<1x128xf32>
    %c0_12 = arith.constant 0 : index
    %c0_13 = arith.constant 0 : index
    %19 = vector.load %arg7[%c0_12, %c0_13] : memref<18x128xf32, #tpu.memory_space<vmem>>, vector<1x128xf32>
    tpu.vector_store %arg7[%c0_12, %c0_13], %18 {strides = array<i32>} : memref<18x128xf32, #tpu.memory_space<vmem>>, vector<1x128xf32>,
    %c1 = arith.constant 1 : index
    %c0_14 = arith.constant 0 : index
    %20 = vector.load %arg7[%c1, %c0_14] : memref<18x128xf32, #tpu.memory_space<vmem>>, vector<16x128xf32>
    tpu.vector_store %arg7[%c1, %c0_14], %17 {strides = array<i32>} : memref<18x128xf32, #tpu.memory_space<vmem>>, vector<16x128xf32>,
    %cst_15 = arith.constant 0.000000e+00 : f32
    %21 = vector.broadcast %cst_15 : f32 to vector<1x128xf32>
    %c17 = arith.constant 17 : index
    %c0_16 = arith.constant 0 : index
    %22 = vector.load %arg7[%c17, %c0_16] : memref<18x128xf32, #tpu.memory_space<vmem>>, vector<1x128xf32>
    tpu.vector_store %arg7[%c17, %c0_16], %21 {strides = array<i32>} : memref<18x128xf32, #tpu.memory_space<vmem>>, vector<1x128xf32>,
    %c0_17 = arith.constant 0 : index
    %c0_18 = arith.constant 0 : index
    %23 = vector.load %arg7[%c0_17, %c0_18] : memref<18x128xf32, #tpu.memory_space<vmem>>, vector<16x128xf32>
    %c0_19 = arith.constant 0 : index
    %c0_20 = arith.constant 0 : index
    %24 = vector.load %arg4[%c0_19, %c0_20] : memref<384x128xf32, #tpu.memory_space<vmem>>, vector<128x128xf32>
    %cst_21 = arith.constant dense<0.000000e+00> : vector<16x128xf32>
    %25 = tpu.matmul %23, %24, %cst_21 {dimension_numbers = #tpu.dot_dimension_numbers<[1], [0], [0], [1], [0, 0, 1, 1], [], []>} : vector<16x128xf32>, vector<128x128xf32>, vector<16x128xf32> -> vector<16x128xf32>
    %c1_22 = arith.constant 1 : index
    %c0_23 = arith.constant 0 : index
    %26 = vector.load %arg7[%c1_22, %c0_23] : memref<18x128xf32, #tpu.memory_space<vmem>>, vector<16x128xf32>
    %c128_24 = arith.constant 128 : index
    %c0_25 = arith.constant 0 : index
    %27 = vector.load %arg4[%c128_24, %c0_25] : memref<384x128xf32, #tpu.memory_space<vmem>>, vector<128x128xf32>
    %cst_26 = arith.constant dense<0.000000e+00> : vector<16x128xf32>
    %28 = tpu.matmul %26, %27, %cst_26 {dimension_numbers = #tpu.dot_dimension_numbers<[1], [0], [0], [1], [0, 0, 1, 1], [], []>} : vector<16x128xf32>, vector<128x128xf32>, vector<16x128xf32> -> vector<16x128xf32>
    %29 = arith.addf %25, %28 : vector<16x128xf32>
    %c2 = arith.constant 2 : index
    %c0_27 = arith.constant 0 : index
    %30 = vector.load %arg7[%c2, %c0_27] : memref<18x128xf32, #tpu.memory_space<vmem>>, vector<16x128xf32>
    %c256_28 = arith.constant 256 : index
    %c0_29 = arith.constant 0 : index
    %31 = vector.load %arg4[%c256_28, %c0_29] : memref<384x128xf32, #tpu.memory_space<vmem>>, vector<128x128xf32>
    %cst_30 = arith.constant dense<0.000000e+00> : vector<16x128xf32>
    %32 = tpu.matmul %30, %31, %cst_30 {dimension_numbers = #tpu.dot_dimension_numbers<[1], [0], [0], [1], [0, 0, 1, 1], [], []>} : vector<16x128xf32>, vector<128x128xf32>, vector<16x128xf32> -> vector<16x128xf32>
    %33 = arith.addf %29, %32 : vector<16x128xf32>
    %c0_31 = arith.constant 0 : index
    %c0_32 = arith.constant 0 : index
    %34 = vector.load %arg5[%c0_31, %c0_32] : memref<1x128xf32, #tpu.memory_space<vmem>>, vector<1x128xf32>
    %35 = vector.broadcast %34 : vector<1x128xf32> to vector<16x128xf32>
    %36 = arith.addf %33, %35 : vector<16x128xf32>
    %c0_33 = arith.constant 0 : index
    %c0_34 = arith.constant 0 : index
    %c0_35 = arith.constant 0 : index
    %37 = vector.load %arg6[%c0_33, %c0_34, %c0_35] : memref<1x16x128xf32, #tpu.memory_space<vmem>>, vector<1x16x128xf32>
    %38 = vector.shape_cast %37 : vector<1x16x128xf32> to vector<16x128xf32>
    %39 = vector.shape_cast %36 : vector<16x128xf32> to vector<1x16x128xf32>
    tpu.vector_store %arg6[%c0_33, %c0_34, %c0_35], %39 {strides = array<i32>} : memref<1x16x128xf32, #tpu.memory_space<vmem>>, vector<1x16x128xf32>,
    return
  }
  func.func @transform_0(%arg0: i32) -> (i32, i32, i32) {
    %c0_i32 = arith.constant 0 : i32
    %c0_i32_0 = arith.constant 0 : i32
    %c0_i32_1 = arith.constant 0 : i32
    return %arg0, %c0_i32, %c0_i32_0 : i32, i32, i32
  }
  func.func @transform_1(%arg0: i32) -> (i32, i32) {
    %c0_i32 = arith.constant 0 : i32
    %c0_i32_0 = arith.constant 0 : i32
    %c0_i32_1 = arith.constant 0 : i32
    return %c0_i32, %c0_i32_0 : i32, i32
  }
  func.func @transform_2(%arg0: i32) -> (i32, i32) {
    %c0_i32 = arith.constant 0 : i32
    %c0_i32_0 = arith.constant 0 : i32
    %c0_i32_1 = arith.constant 0 : i32
    return %c0_i32, %c0_i32_0 : i32, i32
  }
  func.func @transform_3(%arg0: i32) -> (i32, i32) {
    %c0_i32 = arith.constant 0 : i32
    %c0_i32_0 = arith.constant 0 : i32
    %c0_i32_1 = arith.constant 0 : i32
    return %c0_i32, %c0_i32_0 : i32, i32
  }
  func.func @transform_4(%arg0: i32) -> (i32, i32) {
    %c0_i32 = arith.constant 0 : i32
    %c0_i32_0 = arith.constant 0 : i32
    %c0_i32_1 = arith.constant 0 : i32
    return %c0_i32, %c0_i32_0 : i32, i32
  }
  func.func @transform_5(%arg0: i32) -> (i32, i32, i32) {
    %c0_i32 = arith.constant 0 : i32
    %c0_i32_0 = arith.constant 0 : i32
    %c0_i32_1 = arith.constant 0 : i32
    return %arg0, %c0_i32, %c0_i32_0 : i32, i32, i32
  }
}

</mosaic_0001>

<llo_original>
// kernel: tpu_custom_call.1
$region0: #{tpu_custom_call.1}
  #allocation0 [shape = 'u32[]', space=smem, size = 0x4, offset = 0x4, fixed_abs, tag = 'smem constant byte address 0x4 - core index']
  #allocation1 [shape = 'u32[144,128]{1,0:T(1,128)}', space=vmem, size = 0x12000, scoped, tag = 'internal scratch']
  #allocation2 [shape = 'f32[18,128]{1,0:T(8,128)}', space=vmem, size = 0x3000, scoped, tag = 'scratch operand']
  %s0 = inlined_call_operand.vmem [shape: f32[2,18,128], index: 0, kind: input, shape index: {}]
  %s1 = inlined_call_operand.hbm [shape: f32[384,128], index: 1, kind: input, shape index: {}]
  %s2 = inlined_call_operand.vmem [shape: f32[1,128], index: 2, kind: input, shape index: {}]
  %s3 = inlined_call_operand.hbm [shape: f32[384,128], index: 3, kind: input, shape index: {}]
  %s4 = inlined_call_operand.vmem [shape: f32[1,128], index: 4, kind: input, shape index: {}]
  %s5 = inlined_call_operand.hbm [shape: f32[2,16,128], index: 5, kind: output, shape index: {}]
  %s6 = sld [smem:[#allocation0]]
  $region61: #{tpu_custom_call.1} parent=0
    _
  %s8 = ssub.s32 1, %s6
  %s9 = scalar_select 0, %s8, %s6
  $region1: #{tpu_custom_call.1} parent=0
    #allocation3 [shape = 'u8[196608]{0}', space=vmem, size = 0x30000, scoped, tag = 'input window, operand 1, single buffered']
    #allocation4 [shape = 's32[2]{0}', space=sflag, size = 0x8, scoped, tag = 'scoped memory for tpu_custom_call.1']
    #allocation5 [shape = 's32[2]{0}', space=sflag, size = 0x8, scoped, tag = 'scoped memory for tpu_custom_call.1']
    #allocation6 [shape = 'u8[196608]{0}', space=vmem, size = 0x30000, scoped, tag = 'input window, operand 3, single buffered']
    #allocation7 [shape = 's32[1]{0}', space=sflag, size = 0x4, scoped, tag = 'scoped memory for tpu_custom_call.1']
    #allocation8 [shape = 'u8[16384]{0}', space=vmem, size = 0x4000, scoped, tag = 'output window, operand 0']
    %10 = vsyncpa [#allocation4], 0
    %11 = vsyncpa [#allocation7], 0
    %12 = vsyncpa [#allocation5], 0
    %s13 = scalar_lea.sflag [#allocation5], 1
    %14 = vsyncpa %s13, 0
    loop: start=0, step=1, limit=4
    $region2: #{tpu_custom_call.1} parent=1 // loop_pre_header
      _
    $region3: #{tpu_custom_call.1} parent=1 // loop_header
      %s16 = sphi 0, %s20
      %p17 = scmp.ge.s32.totalorder %s16, 4
      %s26 = sphi 0, %s28
      %s29 = sphi 0, %s26
      %s30 = sphi 0, %s29
      %s46 = sphi 0, %s30
      %s50 = sphi 0, %s50
      %s52 = sphi 0, %s50
      %s53 = sphi 0, %s52
      %s67 = sphi 0, %s53
      %s71 = sphi 0, %s71
      %s73 = sphi 0, %s71
      %s74 = sphi 0, %s73
      %s88 = sphi 0, %s74
      %s92 = sphi 0, %s92
      %s94 = sphi 0, %s92
      %s95 = sphi 0, %s94
      %s109 = sphi 0, %s95
      %s113 = sphi 0, %s113
      %s115 = sphi 0, %s113
      %s116 = sphi 0, %s115
      %s130 = sphi 0, %s116
      %s136 = sphi 0, %s138
      %s139 = sphi 0, %s136
      %s140 = sphi 0, %s139
      %s156 = sphi 0, %s140
    $region4: #{tpu_custom_call.1} parent=1 // loop_header_branch
      %19 = sbr.rel (%p17) target = $region8
    $region5: #{tpu_custom_call.1} parent=1 // loop_body
      %s21 = ssub.s32 %s16, 1
      %s22 = ssub.s32 %s16, 2
      %s23 = sadd.s32 %s16, 1
      %s24 = ssub.s32 %s16, %s23
      %p25 = scmp.eq.s32.totalorder %s24, 0
      %s27 = sadd.s32 %s26, 1
      %s28 = scalar_select %p25, %s26, %s27
      %p31 = pneg %p25
      %p32 = scmp.eq.s32.totalorder %s16, 1
      %p33 = por %p31, %p32
      %p34 = scmp.ne.s32.totalorder %s26, %s29
      %p35 = scmp.eq.s32.totalorder %s16, 0
      %p36 = por %p34, %p35
      %p37 = scmp.ne.s32.totalorder %s26, %s29
      %p38 = scmp.eq.s32.totalorder %s21, 1
      %p39 = por %p37, %p38
      %p40 = scmp.ne.s32.totalorder %s29, %s30
      %p41 = scmp.eq.s32.totalorder %s21, 0
      %p42 = por %p40, %p41
      %p43 = scmp.ne.s32.totalorder %s29, %s30
      %p44 = scmp.eq.s32.totalorder %s22, 1
      %p45 = por %p43, %p44
      %p47 = scmp.ne.s32.totalorder %s30, %s46
      %p48 = scmp.eq.s32.totalorder %s22, 0
      %p49 = por %p47, %p48
      %s51 = sadd.s32 %s50, 1
      %p54 = scmp.eq.s32.totalorder %s16, 1
      %p55 = scmp.ne.s32.totalorder %s50, %s52
      %p56 = scmp.eq.s32.totalorder %s16, 0
      %p57 = por %p55, %p56
      %p58 = scmp.ne.s32.totalorder %s50, %s52
      %p59 = scmp.eq.s32.totalorder %s21, 1
      %p60 = por %p58, %p59
      %p61 = scmp.ne.s32.totalorder %s52, %s53
      %p62 = scmp.eq.s32.totalorder %s21, 0
      %p63 = por %p61, %p62
      %p64 = scmp.ne.s32.totalorder %s52, %s53
      %p65 = scmp.eq.s32.totalorder %s22, 1
      %p66 = por %p64, %p65
      %p68 = scmp.ne.s32.totalorder %s53, %s67
      %p69 = scmp.eq.s32.totalorder %s22, 0
      %p70 = por %p68, %p69
      %s72 = sadd.s32 %s71, 1
      %p75 = scmp.eq.s32.totalorder %s16, 1
      %p76 = scmp.ne.s32.totalorder %s71, %s73
      %p77 = scmp.eq.s32.totalorder %s16, 0
      %p78 = por %p76, %p77
      %p79 = scmp.ne.s32.totalorder %s71, %s73
      %p80 = scmp.eq.s32.totalorder %s21, 1
      %p81 = por %p79, %p80
      %p82 = scmp.ne.s32.totalorder %s73, %s74
      %p83 = scmp.eq.s32.totalorder %s21, 0
      %p84 = por %p82, %p83
      %p85 = scmp.ne.s32.totalorder %s73, %s74
      %p86 = scmp.eq.s32.totalorder %s22, 1
      %p87 = por %p85, %p86
      %p89 = scmp.ne.s32.totalorder %s74, %s88
      %p90 = scmp.eq.s32.totalorder %s22, 0
      %p91 = por %p89, %p90
      %s93 = sadd.s32 %s92, 1
      %p96 = scmp.eq.s32.totalorder %s16, 1
      %p97 = scmp.ne.s32.totalorder %s92, %s94
      %p98 = scmp.eq.s32.totalorder %s16, 0
      %p99 = por %p97, %p98
      %p100 = scmp.ne.s32.totalorder %s92, %s94
      %p101 = scmp.eq.s32.totalorder %s21, 1
      %p102 = por %p100, %p101
      %p103 = scmp.ne.s32.totalorder %s94, %s95
      %p104 = scmp.eq.s32.totalorder %s21, 0
      %p105 = por %p103, %p104
      %p106 = scmp.ne.s32.totalorder %s94, %s95
      %p107 = scmp.eq.s32.totalorder %s22, 1
      %p108 = por %p106, %p107
      %p110 = scmp.ne.s32.totalorder %s95, %s109
      %p111 = scmp.eq.s32.totalorder %s22, 0
      %p112 = por %p110, %p111
      %s114 = sadd.s32 %s113, 1
      %p117 = scmp.eq.s32.totalorder %s16, 1
      %p118 = scmp.ne.s32.totalorder %s113, %s115
      %p119 = scmp.eq.s32.totalorder %s16, 0
      %p120 = por %p118, %p119
      %p121 = scmp.ne.s32.totalorder %s113, %s115
      %p122 = scmp.eq.s32.totalorder %s21, 1
      %p123 = por %p121, %p122
      %p124 = scmp.ne.s32.totalorder %s115, %s116
      %p125 = scmp.eq.s32.totalorder %s21, 0
      %p126 = por %p124, %p125
      %p127 = scmp.ne.s32.totalorder %s115, %s116
      %p128 = scmp.eq.s32.totalorder %s22, 1
      %p129 = por %p127, %p128
      %p131 = scmp.ne.s32.totalorder %s116, %s130
      %p132 = scmp.eq.s32.totalorder %s22, 0
      %p133 = por %p131, %p132
      %s134 = ssub.s32 %s16, %s23
      %p135 = scmp.eq.s32.totalorder %s134, 0
      %s137 = sadd.s32 %s136, 1
      %s138 = scalar_select %p135, %s136, %s137
      %p141 = pneg %p135
      %p142 = scmp.eq.s32.totalorder %s16, 1
      %p143 = por %p141, %p142
      %p144 = scmp.ne.s32.totalorder %s136, %s139
      %p145 = scmp.eq.s32.totalorder %s16, 0
      %p146 = por %p144, %p145
      %p147 = scmp.ne.s32.totalorder %s136, %s139
      %p148 = scmp.eq.s32.totalorder %s21, 1
      %p149 = por %p147, %p148
      %p150 = scmp.ne.s32.totalorder %s139, %s140
      %p151 = scmp.eq.s32.totalorder %s21, 0
      %p152 = por %p150, %p151
      %p153 = scmp.ne.s32.totalorder %s139, %s140
      %p154 = scmp.eq.s32.totalorder %s22, 1
      %p155 = por %p153, %p154
      %p157 = scmp.ne.s32.totalorder %s140, %s156
      %p158 = scmp.eq.s32.totalorder %s22, 0
      %p159 = por %p157, %p158
      %p160 = scmp.le.s32.totalorder 1, %s16
      %p161 = scmp.lt.s32.totalorder %s16, 3
      %p162 = pnand %p160, %p161
      %p163 = pneg %p162
      // Predicated region
      $region9: #{tpu_custom_call.1} parent=5 // pred_check
        _
      $region10: #{tpu_custom_call.1} parent=5 // pred_check_branch
        %165 = sbr.rel (%p162) target = $region12
      $region11: #{tpu_custom_call.1} parent=5 // pred_region
        %s166 = ssub.s32 %s16, 1
        // Predicated region
        $region13: #{tpu_custom_call.1} parent=11 // pred_check
          %p167 = pneg %p63
        $region14: #{tpu_custom_call.1} parent=11 // pred_check_branch
          %169 = sbr.rel (%p167) target = $region16
        $region15: #{tpu_custom_call.1} parent=11 // pred_region
          %s171 = ssub.s32 6144, 6144
          %172 = vsyncadd [#allocation4], %s171
          %s173 = sshll.u32 [#allocation3], 4
          %s174 = int_to_ptr.vmem [resolvable:$true] %s173
          %179 = dma.hbm_to_vmem [thread:$0]  %s1, 6144, %s174, [#allocation4], 128, 128, 8
        $region16: #{tpu_custom_call.1} parent=11 // pred_fallthru
          _
        // Predicated region
        $region17: #{tpu_custom_call.1} parent=11 // pred_check
          %p180 = pneg %p84
        $region18: #{tpu_custom_call.1} parent=11 // pred_check_branch
          %182 = sbr.rel (%p180) target = $region20
        $region19: #{tpu_custom_call.1} parent=11 // pred_region
          _
        $region20: #{tpu_custom_call.1} parent=11 // pred_fallthru
          _
        // Predicated region
        $region21: #{tpu_custom_call.1} parent=11 // pred_check
          %p183 = pneg %p105
        $region22: #{tpu_custom_call.1} parent=11 // pred_check_branch
          %185 = sbr.rel (%p183) target = $region24
        $region23: #{tpu_custom_call.1} parent=11 // pred_region
          %s187 = ssub.s32 6144, 6144
          %188 = vsyncadd [#allocation7], %s187
          %s189 = sshll.u32 [#allocation6], 4
          %s190 = int_to_ptr.vmem [resolvable:$true] %s189
          %195 = dma.hbm_to_vmem [thread:$0]  %s3, 6144, %s190, [#allocation7], 128, 128, 8
        $region24: #{tpu_custom_call.1} parent=11 // pred_fallthru
          _
        // Predicated region
        $region25: #{tpu_custom_call.1} parent=11 // pred_check
          %p196 = pneg %p126
        $region26: #{tpu_custom_call.1} parent=11 // pred_check_branch
          %198 = sbr.rel (%p196) target = $region28
        $region27: #{tpu_custom_call.1} parent=11 // pred_region
          _
        $region28: #{tpu_custom_call.1} parent=11 // pred_fallthru
          _
      $region12: #{tpu_custom_call.1} parent=5 // pred_fallthru
        _
      %p199 = scmp.lt.s32.totalorder %s16, 2
      // Predicated region
      $region29: #{tpu_custom_call.1} parent=5 // pred_check
        %p200 = pneg %p199
      $region30: #{tpu_custom_call.1} parent=5 // pred_check_branch
        %202 = sbr.rel (%p200) target = $region32
      $region31: #{tpu_custom_call.1} parent=5 // pred_region
        // Predicated region
        $region33: #{tpu_custom_call.1} parent=31 // pred_check
          %p203 = pneg %p36
        $region34: #{tpu_custom_call.1} parent=31 // pred_check_branch
          %205 = sbr.rel (%p203) target = $region36
        $region35: #{tpu_custom_call.1} parent=31 // pred_region
          %p206 = scmp.lt.s32.totalorder %s16, 1
          %s207 = scalar_select %p206, %s16, 1
          %s208 = smul.addr %s207, 3
          %s209 = smul.addr %s208, 8
          %s210 = scalar_lea.vmem %s0, %s209
        $region36: #{tpu_custom_call.1} parent=31 // pred_fallthru
          _
      $region32: #{tpu_custom_call.1} parent=5 // pred_fallthru
        _
      %p211 = scmp.le.s32.totalorder 1, %s16
      %p212 = scmp.lt.s32.totalorder %s16, 3
      %p213 = pnand %p211, %p212
      %p214 = pneg %p213
      // Predicated region
      $region37: #{tpu_custom_call.1} parent=5 // pred_check
        _
      $region38: #{tpu_custom_call.1} parent=5 // pred_check_branch
        %216 = sbr.rel (%p213) target = $region40
      $region39: #{tpu_custom_call.1} parent=5 // pred_region
        %s217 = ssub.s32 %s16, 1
        // Predicated region
        $region41: #{tpu_custom_call.1} parent=39 // pred_check
          %p218 = pneg %p63
        $region42: #{tpu_custom_call.1} parent=39 // pred_check_branch
          %220 = sbr.rel (%p218) target = $region44
        $region43: #{tpu_custom_call.1} parent=39 // pred_region
          %221 = dma.done [#allocation4], 6144
        $region44: #{tpu_custom_call.1} parent=39 // pred_fallthru
          _
        // Predicated region
        $region45: #{tpu_custom_call.1} parent=39 // pred_check
          %p222 = pneg %p105
        $region46: #{tpu_custom_call.1} parent=39 // pred_check_branch
          %224 = sbr.rel (%p222) target = $region48
        $region47: #{tpu_custom_call.1} parent=39 // pred_region
          %225 = dma.done [#allocation7], 6144
        $region48: #{tpu_custom_call.1} parent=39 // pred_fallthru
          _
        %p226 = scmp.lt.s32.totalorder %s21, 1
        %s227 = scalar_select %p226, %s21, 1
        %s228 = smul.addr %s227, 3
        %s229 = smul.addr %s228, 8
        %s230 = scalar_lea.vmem %s0, %s229
        %p231 = pneg %p42
        %p232 = pneg %p39
        %p233 = pneg %p63
        %p234 = pneg %p60
        %p235 = pneg %p84
        %p236 = pneg %p81
        %p237 = pneg %p105
        %p238 = pneg %p102
        %p239 = pneg %p126
        %p240 = pneg %p123
        %p241 = pneg %p152
        %p242 = pneg %p149
        %s243 = sand.u32 %s139, 1
        %s244 = scalar_lea.sflag [#allocation5], %s243
        %s245 = sand.u32 %s139, 1
        %s246 = smul.addr %s245, 16
        %s247 = scalar_lea.vmem [#allocation8], %s246
        %p248 = scmp.lt.s32.totalorder %s21, 1
        %s249 = scalar_select %p248, %s21, 1
        %s250 = smul.addr %s249, 3
        %s251 = smul.addr %s250, 8
        %s252 = scalar_lea.vmem %s0, %s251
        %v253 = vld [vmem:[%s252] sm:$0xff]
        %v254 = vld [vmem:[%s252 + $0x8] sm:$0xff]
        %v255 = vld [vmem:[%s252 + $0x10] sm:$0x3]
        %v256 = vld [vmem:[#allocation3] sm:$0xff]
        %v257 = vld [vmem:[#allocation3 + $0x8] sm:$0xff]
        %v258 = vld [vmem:[#allocation3 + $0x10] sm:$0xff]
        %v259 = vld [vmem:[#allocation3 + $0x18] sm:$0xff]
        %v260 = vld [vmem:[#allocation3 + $0x20] sm:$0xff]
        %v261 = vld [vmem:[#allocation3 + $0x28] sm:$0xff]
        %v262 = vld [vmem:[#allocation3 + $0x30] sm:$0xff]
        %v263 = vld [vmem:[#allocation3 + $0x38] sm:$0xff]
        %v264 = vld [vmem:[#allocation3 + $0x40] sm:$0xff]
        %v265 = vld [vmem:[#allocation3 + $0x48] sm:$0xff]
        %v266 = vld [vmem:[#allocation3 + $0x50] sm:$0xff]
        %v267 = vld [vmem:[#allocation3 + $0x58] sm:$0xff]
        %v268 = vld [vmem:[#allocation3 + $0x60] sm:$0xff]
        %v269 = vld [vmem:[#allocation3 + $0x68] sm:$0xff]
        %v270 = vld [vmem:[#allocation3 + $0x70] sm:$0xff]
        %v271 = vld [vmem:[#allocation3 + $0x78] sm:$0xff]
        %v272 = vld [vmem:[#allocation3 + $0x80] sm:$0xff]
        %v273 = vld [vmem:[#allocation3 + $0x88] sm:$0xff]
        %v274 = vld [vmem:[#allocation3 + $0x90] sm:$0xff]
        %v275 = vld [vmem:[#allocation3 + $0x98] sm:$0xff]
        %v276 = vld [vmem:[#allocation3 + $0xa0] sm:$0xff]
        %v277 = vld [vmem:[#allocation3 + $0xa8] sm:$0xff]
        %v278 = vld [vmem:[#allocation3 + $0xb0] sm:$0xff]
        %v279 = vld [vmem:[#allocation3 + $0xb8] sm:$0xff]
        %v280 = vld [vmem:[#allocation3 + $0xc0] sm:$0xff]
        %v281 = vld [vmem:[#allocation3 + $0xc8] sm:$0xff]
        %v282 = vld [vmem:[#allocation3 + $0xd0] sm:$0xff]
        %v283 = vld [vmem:[#allocation3 + $0xd8] sm:$0xff]
        %v284 = vld [vmem:[#allocation3 + $0xe0] sm:$0xff]
        %v285 = vld [vmem:[#allocation3 + $0xe8] sm:$0xff]
        %v286 = vld [vmem:[#allocation3 + $0xf0] sm:$0xff]
        %v287 = vld [vmem:[#allocation3 + $0xf8] sm:$0xff]
        %vm291 = vcmask 1046528
        %v292 = vrot.slane %v253, 1
        %v293 = vrot.slane %v254, 1
        %v294 = vsel %vm291, %v292, %v293
        %v295 = vrot.slane %v255, 1
        %v296 = vsel %vm291, %v293, %v295
        %299 = vmatprep.subr.mxu0 0.0
        %300 = vmatpush1.msra.mxu0 %v287
        %301 = vmatprep.subr.mxu0 0.0
        %302 = vmatpush1.msra.mxu0 %v286
        %303 = vmatprep.subr.mxu0 0.0
        %304 = vmatpush1.msra.mxu0 %v285
        %305 = vmatprep.subr.mxu0 0.0
        %306 = vmatpush1.msra.mxu0 %v284
        %307 = vmatprep.subr.mxu0 0.0
        %308 = vmatpush1.msra.mxu0 %v283
        %309 = vmatprep.subr.mxu0 0.0
        %310 = vmatpush1.msra.mxu0 %v282
        %311 = vmatprep.subr.mxu0 0.0
        %312 = vmatpush1.msra.mxu0 %v281
        %313 = vmatprep.subr.mxu0 0.0
        %314 = vmatpush1.msra.mxu0 %v280
        %315 = vmatprep.subr.mxu0 0.0
        %316 = vmatpush1.msra.mxu0 %v279
        %317 = vmatprep.subr.mxu0 0.0
        %318 = vmatpush1.msra.mxu0 %v278
        %319 = vmatprep.subr.mxu0 0.0
        %320 = vmatpush1.msra.mxu0 %v277
        %321 = vmatprep.subr.mxu0 0.0
        %322 = vmatpush1.msra.mxu0 %v276
        %323 = vmatprep.subr.mxu0 0.0
        %324 = vmatpush1.msra.mxu0 %v275
        %325 = vmatprep.subr.mxu0 0.0
        %326 = vmatpush1.msra.mxu0 %v274
        %327 = vmatprep.subr.mxu0 0.0
        %328 = vmatpush1.msra.mxu0 %v273
        %329 = vmatprep.subr.mxu0 0.0
        %330 = vmatpush1.msra.mxu0 %v272
        %331 = vmatprep.subr.mxu0 0.0
        %332 = vmatpush2.msra.mxu0 0.0
        %333 = vmatprep.subr.mxu0 0.0
        %334 = vmatpush2.msra.mxu0 0.0
        %335 = vmatprep.subr.mxu0 0.0
        %336 = vmatpush2.msra.mxu0 0.0
        %337 = vmatprep.subr.mxu0 0.0
        %338 = vmatpush2.msra.mxu0 0.0
        %339 = vmatprep.subr.mxu0 0.0
        %340 = vmatpush2.msra.mxu0 0.0
        %341 = vmatprep.subr.mxu0 0.0
        %342 = vmatpush2.msra.mxu0 0.0
        %343 = vmatprep.subr.mxu0 0.0
        %344 = vmatpush2.msra.mxu0 0.0
        %345 = vmatprep.subr.mxu0 0.0
        %346 = vmatpush2.msra.mxu0 0.0
        %347 = vmatprep.subr.mxu0 0.0
        %348 = vmatpush2.msra.mxu0 0.0
        %349 = vmatprep.subr.mxu0 0.0
        %350 = vmatpush2.msra.mxu0 0.0
        %351 = vmatprep.subr.mxu0 0.0
        %352 = vmatpush2.msra.mxu0 0.0
        %353 = vmatprep.subr.mxu0 0.0
        %354 = vmatpush2.msra.mxu0 0.0
        %355 = vmatprep.subr.mxu0 0.0
        %356 = vmatpush2.msra.mxu0 0.0
        %357 = vmatprep.subr.mxu0 0.0
        %358 = vmatpush2.msra.mxu0 0.0
        %359 = vmatprep.subr.mxu0 0.0
        %360 = vmatpush2.msra.mxu0 0.0
        %361 = vmatprep.subr.mxu0 0.0
        %362 = vmatpush2.msra.mxu0 0.0
        %363 = vmatprep.mubr.f32.mxu0 0.0
        %364 = vmatmul.mubr.f32.gmra.mxu0 %v294
        %v365 = vpop.f32.mrf.mxu0
        %v366 = vadd.f32 0.0, %v365
        %v367 = vpop.f32.mrf.mxu0
        %368 = vmatprep.mubr.f32.mxu0 0.0
        %369 = vmatmul.mubr.f32.gmra.mxu0 %v296
        %v370 = vpop.f32.mrf.mxu0
        %v371 = vadd.f32 0.0, %v370
        %v372 = vpop.f32.mrf.mxu0
        %373 = vdwg.mxu0
        %374 = vmatprep.subr.mxu0 0.0
        %375 = vmatpush1.msra.mxu0 %v271
        %376 = vmatprep.subr.mxu0 0.0
        %377 = vmatpush1.msra.mxu0 %v270
        %378 = vmatprep.subr.mxu0 0.0
        %379 = vmatpush1.msra.mxu0 %v269
        %380 = vmatprep.subr.mxu0 0.0
        %381 = vmatpush1.msra.mxu0 %v268
        %382 = vmatprep.subr.mxu0 0.0
        %383 = vmatpush1.msra.mxu0 %v267
        %384 = vmatprep.subr.mxu0 0.0
        %385 = vmatpush1.msra.mxu0 %v266
        %386 = vmatprep.subr.mxu0 0.0
        %387 = vmatpush1.msra.mxu0 %v265
        %388 = vmatprep.subr.mxu0 0.0
        %389 = vmatpush1.msra.mxu0 %v264
        %390 = vmatprep.subr.mxu0 0.0
        %391 = vmatpush1.msra.mxu0 %v263
        %392 = vmatprep.subr.mxu0 0.0
        %393 = vmatpush1.msra.mxu0 %v262
        %394 = vmatprep.subr.mxu0 0.0
        %395 = vmatpush1.msra.mxu0 %v261
        %396 = vmatprep.subr.mxu0 0.0
        %397 = vmatpush1.msra.mxu0 %v260
        %398 = vmatprep.subr.mxu0 0.0
        %399 = vmatpush1.msra.mxu0 %v259
        %400 = vmatprep.subr.mxu0 0.0
        %401 = vmatpush1.msra.mxu0 %v258
        %402 = vmatprep.subr.mxu0 0.0
        %403 = vmatpush1.msra.mxu0 %v257
        %404 = vmatprep.subr.mxu0 0.0
        %405 = vmatpush1.msra.mxu0 %v256
        %406 = vmatprep.subr.mxu0 0.0
        %407 = vmatpush2.msra.mxu0 0.0
        %408 = vmatprep.subr.mxu0 0.0
        %409 = vmatpush2.msra.mxu0 0.0
        %410 = vmatprep.subr.mxu0 0.0
        %411 = vmatpush2.msra.mxu0 0.0
        %412 = vmatprep.subr.mxu0 0.0
        %413 = vmatpush2.msra.mxu0 0.0
        %414 = vmatprep.subr.mxu0 0.0
        %415 = vmatpush2.msra.mxu0 0.0
        %416 = vmatprep.subr.mxu0 0.0
        %417 = vmatpush2.msra.mxu0 0.0
        %418 = vmatprep.subr.mxu0 0.0
        %419 = vmatpush2.msra.mxu0 0.0
        %420 = vmatprep.subr.mxu0 0.0
        %421 = vmatpush2.msra.mxu0 0.0
        %422 = vmatprep.subr.mxu0 0.0
        %423 = vmatpush2.msra.mxu0 0.0
        %424 = vmatprep.subr.mxu0 0.0
        %425 = vmatpush2.msra.mxu0 0.0
        %426 = vmatprep.subr.mxu0 0.0
        %427 = vmatpush2.msra.mxu0 0.0
        %428 = vmatprep.subr.mxu0 0.0
        %429 = vmatpush2.msra.mxu0 0.0
        %430 = vmatprep.subr.mxu0 0.0
        %431 = vmatpush2.msra.mxu0 0.0
        %432 = vmatprep.subr.mxu0 0.0
        %433 = vmatpush2.msra.mxu0 0.0
        %434 = vmatprep.subr.mxu0 0.0
        %435 = vmatpush2.msra.mxu0 0.0
        %436 = vmatprep.subr.mxu0 0.0
        %437 = vmatpush2.msra.mxu0 0.0
        %438 = vmatprep.mubr.f32.mxu0 0.0
        %439 = vmatmul.mubr.f32.gmra.mxu0 %v253
        %v440 = vpop.f32.mrf.mxu0
        %v441 = vadd.f32 %v366, %v440
        %v442 = vpop.f32.mrf.mxu0
        %443 = vmatprep.mubr.f32.mxu0 0.0
        %444 = vmatmul.mubr.f32.gmra.mxu0 %v254
        %v445 = vpop.f32.mrf.mxu0
        %v446 = vadd.f32 %v371, %v445
        %v447 = vpop.f32.mrf.mxu0
        %448 = vdwg.mxu0
        %v449 = vld [vmem:[#allocation3 + $0x100] sm:$0xff]
        %v450 = vld [vmem:[#allocation3 + $0x108] sm:$0xff]
        %v451 = vld [vmem:[#allocation3 + $0x110] sm:$0xff]
        %v452 = vld [vmem:[#allocation3 + $0x118] sm:$0xff]
        %v453 = vld [vmem:[#allocation3 + $0x120] sm:$0xff]
        %v454 = vld [vmem:[#allocation3 + $0x128] sm:$0xff]
        %v455 = vld [vmem:[#allocation3 + $0x130] sm:$0xff]
        %v456 = vld [vmem:[#allocation3 + $0x138] sm:$0xff]
        %v457 = vld [vmem:[#allocation3 + $0x140] sm:$0xff]
        %v458 = vld [vmem:[#allocation3 + $0x148] sm:$0xff]
        %v459 = vld [vmem:[#allocation3 + $0x150] sm:$0xff]
        %v460 = vld [vmem:[#allocation3 + $0x158] sm:$0xff]
        %v461 = vld [vmem:[#allocation3 + $0x160] sm:$0xff]
        %v462 = vld [vmem:[#allocation3 + $0x168] sm:$0xff]
        %v463 = vld [vmem:[#allocation3 + $0x170] sm:$0xff]
        %v464 = vld [vmem:[#allocation3 + $0x178] sm:$0xff]
        %vm465 = vcmask 1045504
        %v466 = vrot.slane %v253, 2
        %v467 = vrot.slane %v254, 2
        %v468 = vsel %vm465, %v466, %v467
        %v469 = vrot.slane %v255, 2
        %v470 = vsel %vm465, %v467, %v469
        %473 = vmatprep.subr.mxu0 0.0
        %474 = vmatpush1.msra.mxu0 %v464
        %475 = vmatprep.subr.mxu0 0.0
        %476 = vmatpush1.msra.mxu0 %v463
        %477 = vmatprep.subr.mxu0 0.0
        %478 = vmatpush1.msra.mxu0 %v462
        %479 = vmatprep.subr.mxu0 0.0
        %480 = vmatpush1.msra.mxu0 %v461
        %481 = vmatprep.subr.mxu0 0.0
        %482 = vmatpush1.msra.mxu0 %v460
        %483 = vmatprep.subr.mxu0 0.0
        %484 = vmatpush1.msra.mxu0 %v459
        %485 = vmatprep.subr.mxu0 0.0
        %486 = vmatpush1.msra.mxu0 %v458
        %487 = vmatprep.subr.mxu0 0.0
        %488 = vmatpush1.msra.mxu0 %v457
        %489 = vmatprep.subr.mxu0 0.0
        %490 = vmatpush1.msra.mxu0 %v456
        %491 = vmatprep.subr.mxu0 0.0
        %492 = vmatpush1.msra.mxu0 %v455
        %493 = vmatprep.subr.mxu0 0.0
        %494 = vmatpush1.msra.mxu0 %v454
        %495 = vmatprep.subr.mxu0 0.0
        %496 = vmatpush1.msra.mxu0 %v453
        %497 = vmatprep.subr.mxu0 0.0
        %498 = vmatpush1.msra.mxu0 %v452
        %499 = vmatprep.subr.mxu0 0.0
        %500 = vmatpush1.msra.mxu0 %v451
        %501 = vmatprep.subr.mxu0 0.0
        %502 = vmatpush1.msra.mxu0 %v450
        %503 = vmatprep.subr.mxu0 0.0
        %504 = vmatpush1.msra.mxu0 %v449
        %505 = vmatprep.subr.mxu0 0.0
        %506 = vmatpush2.msra.mxu0 0.0
        %507 = vmatprep.subr.mxu0 0.0
        %508 = vmatpush2.msra.mxu0 0.0
        %509 = vmatprep.subr.mxu0 0.0
        %510 = vmatpush2.msra.mxu0 0.0
        %511 = vmatprep.subr.mxu0 0.0
        %512 = vmatpush2.msra.mxu0 0.0
        %513 = vmatprep.subr.mxu0 0.0
        %514 = vmatpush2.msra.mxu0 0.0
        %515 = vmatprep.subr.mxu0 0.0
        %516 = vmatpush2.msra.mxu0 0.0
        %517 = vmatprep.subr.mxu0 0.0
        %518 = vmatpush2.msra.mxu0 0.0
        %519 = vmatprep.subr.mxu0 0.0
        %520 = vmatpush2.msra.mxu0 0.0
        %521 = vmatprep.subr.mxu0 0.0
        %522 = vmatpush2.msra.mxu0 0.0
        %523 = vmatprep.subr.mxu0 0.0
        %524 = vmatpush2.msra.mxu0 0.0
        %525 = vmatprep.subr.mxu0 0.0
        %526 = vmatpush2.msra.mxu0 0.0
        %527 = vmatprep.subr.mxu0 0.0
        %528 = vmatpush2.msra.mxu0 0.0
        %529 = vmatprep.subr.mxu0 0.0
        %530 = vmatpush2.msra.mxu0 0.0
        %531 = vmatprep.subr.mxu0 0.0
        %532 = vmatpush2.msra.mxu0 0.0
        %533 = vmatprep.subr.mxu0 0.0
        %534 = vmatpush2.msra.mxu0 0.0
        %535 = vmatprep.subr.mxu0 0.0
        %536 = vmatpush2.msra.mxu0 0.0
        %537 = vmatprep.mubr.f32.mxu0 0.0
        %538 = vmatmul.mubr.f32.gmra.mxu0 %v468
        %v539 = vpop.f32.mrf.mxu0
        %v540 = vadd.f32 0.0, %v539
        %v541 = vpop.f32.mrf.mxu0
        %542 = vmatprep.mubr.f32.mxu0 0.0
        %543 = vmatmul.mubr.f32.gmra.mxu0 %v470
        %v544 = vpop.f32.mrf.mxu0
        %v545 = vadd.f32 0.0, %v544
        %v546 = vpop.f32.mrf.mxu0
        %547 = vdwg.mxu0
        %v548 = vadd.f32 %v441, %v540
        %v549 = vadd.f32 %v446, %v545
        %v550 = vld [vmem:[%s2] sm:$0x1]
        %v552 = vlaneseq
        %v553 = vshrl.u32 %v552, 7
        %v554 = vsub.s32 0, %v553
        %v555 = vrot.slane %v550, %v554
        %v557 = vadd.f32 %v548, %v555
        %v558 = vadd.f32 %v549, %v555
        %v559 = vmax.f32 %v557, 0.0
        %v560 = vmax.f32 %v558, 0.0
        %561 = vst [vmem:[#allocation2] sm:$0x1] 0.0
        %562 = vst [vmem:[#allocation2 + $0x1] sm:$0xff] %v559
        %563 = vst [vmem:[#allocation2 + $0x9] sm:$0xff] %v560
        %564 = vst [vmem:[#allocation2 + $0x11] sm:$0x1] 0.0
        %v565 = vld [vmem:[#allocation2] sm:$0xff]
        %v566 = vld [vmem:[#allocation2 + $0x8] sm:$0xff]
        %v567 = vld [vmem:[#allocation6] sm:$0xff]
        %v568 = vld [vmem:[#allocation6 + $0x8] sm:$0xff]
        %v569 = vld [vmem:[#allocation6 + $0x10] sm:$0xff]
        %v570 = vld [vmem:[#allocation6 + $0x18] sm:$0xff]
        %v571 = vld [vmem:[#allocation6 + $0x20] sm:$0xff]
        %v572 = vld [vmem:[#allocation6 + $0x28] sm:$0xff]
        %v573 = vld [vmem:[#allocation6 + $0x30] sm:$0xff]
        %v574 = vld [vmem:[#allocation6 + $0x38] sm:$0xff]
        %v575 = vld [vmem:[#allocation6 + $0x40] sm:$0xff]
        %v576 = vld [vmem:[#allocation6 + $0x48] sm:$0xff]
        %v577 = vld [vmem:[#allocation6 + $0x50] sm:$0xff]
        %v578 = vld [vmem:[#allocation6 + $0x58] sm:$0xff]
        %v579 = vld [vmem:[#allocation6 + $0x60] sm:$0xff]
        %v580 = vld [vmem:[#allocation6 + $0x68] sm:$0xff]
        %v581 = vld [vmem:[#allocation6 + $0x70] sm:$0xff]
        %v582 = vld [vmem:[#allocation6 + $0x78] sm:$0xff]
        %v583 = vld [vmem:[#allocation2 + $0x1] sm:$0xff]
        %v584 = vld [vmem:[#allocation2 + $0x9] sm:$0xff]
        %v585 = vld [vmem:[#allocation6 + $0x80] sm:$0xff]
        %v586 = vld [vmem:[#allocation6 + $0x88] sm:$0xff]
        %v587 = vld [vmem:[#allocation6 + $0x90] sm:$0xff]
        %v588 = vld [vmem:[#allocation6 + $0x98] sm:$0xff]
        %v589 = vld [vmem:[#allocation6 + $0xa0] sm:$0xff]
        %v590 = vld [vmem:[#allocation6 + $0xa8] sm:$0xff]
        %v591 = vld [vmem:[#allocation6 + $0xb0] sm:$0xff]
        %v592 = vld [vmem:[#allocation6 + $0xb8] sm:$0xff]
        %v593 = vld [vmem:[#allocation6 + $0xc0] sm:$0xff]
        %v594 = vld [vmem:[#allocation6 + $0xc8] sm:$0xff]
        %v595 = vld [vmem:[#allocation6 + $0xd0] sm:$0xff]
        %v596 = vld [vmem:[#allocation6 + $0xd8] sm:$0xff]
        %v597 = vld [vmem:[#allocation6 + $0xe0] sm:$0xff]
        %v598 = vld [vmem:[#allocation6 + $0xe8] sm:$0xff]
        %v599 = vld [vmem:[#allocation6 + $0xf0] sm:$0xff]
        %v600 = vld [vmem:[#allocation6 + $0xf8] sm:$0xff]
        %601 = vmatprep.subr.mxu0 0.0
        %602 = vmatpush1.msra.mxu0 %v600
        %603 = vmatprep.subr.mxu0 0.0
        %604 = vmatpush1.msra.mxu0 %v599
        %605 = vmatprep.subr.mxu0 0.0
        %606 = vmatpush1.msra.mxu0 %v598
        %607 = vmatprep.subr.mxu0 0.0
        %608 = vmatpush1.msra.mxu0 %v597
        %609 = vmatprep.subr.mxu0 0.0
        %610 = vmatpush1.msra.mxu0 %v596
        %611 = vmatprep.subr.mxu0 0.0
        %612 = vmatpush1.msra.mxu0 %v595
        %613 = vmatprep.subr.mxu0 0.0
        %614 = vmatpush1.msra.mxu0 %v594
        %615 = vmatprep.subr.mxu0 0.0
        %616 = vmatpush1.msra.mxu0 %v593
        %617 = vmatprep.subr.mxu0 0.0
        %618 = vmatpush1.msra.mxu0 %v592
        %619 = vmatprep.subr.mxu0 0.0
        %620 = vmatpush1.msra.mxu0 %v591
        %621 = vmatprep.subr.mxu0 0.0
        %622 = vmatpush1.msra.mxu0 %v590
        %623 = vmatprep.subr.mxu0 0.0
        %624 = vmatpush1.msra.mxu0 %v589
        %625 = vmatprep.subr.mxu0 0.0
        %626 = vmatpush1.msra.mxu0 %v588
        %627 = vmatprep.subr.mxu0 0.0
        %628 = vmatpush1.msra.mxu0 %v587
        %629 = vmatprep.subr.mxu0 0.0
        %630 = vmatpush1.msra.mxu0 %v586
        %631 = vmatprep.subr.mxu0 0.0
        %632 = vmatpush1.msra.mxu0 %v585
        %633 = vmatprep.subr.mxu0 0.0
        %634 = vmatpush2.msra.mxu0 0.0
        %635 = vmatprep.subr.mxu0 0.0
        %636 = vmatpush2.msra.mxu0 0.0
        %637 = vmatprep.subr.mxu0 0.0
        %638 = vmatpush2.msra.mxu0 0.0
        %639 = vmatprep.subr.mxu0 0.0
        %640 = vmatpush2.msra.mxu0 0.0
        %641 = vmatprep.subr.mxu0 0.0
        %642 = vmatpush2.msra.mxu0 0.0
        %643 = vmatprep.subr.mxu0 0.0
        %644 = vmatpush2.msra.mxu0 0.0
        %645 = vmatprep.subr.mxu0 0.0
        %646 = vmatpush2.msra.mxu0 0.0
        %647 = vmatprep.subr.mxu0 0.0
        %648 = vmatpush2.msra.mxu0 0.0
        %649 = vmatprep.subr.mxu0 0.0
        %650 = vmatpush2.msra.mxu0 0.0
        %651 = vmatprep.subr.mxu0 0.0
        %652 = vmatpush2.msra.mxu0 0.0
        %653 = vmatprep.subr.mxu0 0.0
        %654 = vmatpush2.msra.mxu0 0.0
        %655 = vmatprep.subr.mxu0 0.0
        %656 = vmatpush2.msra.mxu0 0.0
        %657 = vmatprep.subr.mxu0 0.0
        %658 = vmatpush2.msra.mxu0 0.0
        %659 = vmatprep.subr.mxu0 0.0
        %660 = vmatpush2.msra.mxu0 0.0
        %661 = vmatprep.subr.mxu0 0.0
        %662 = vmatpush2.msra.mxu0 0.0
        %663 = vmatprep.subr.mxu0 0.0
        %664 = vmatpush2.msra.mxu0 0.0
        %665 = vmatprep.mubr.f32.mxu0 0.0
        %666 = vmatmul.mubr.f32.gmra.mxu0 %v583
        %v667 = vpop.f32.mrf.mxu0
        %v668 = vadd.f32 0.0, %v667
        %v669 = vpop.f32.mrf.mxu0
        %670 = vmatprep.mubr.f32.mxu0 0.0
        %671 = vmatmul.mubr.f32.gmra.mxu0 %v584
        %v672 = vpop.f32.mrf.mxu0
        %v673 = vadd.f32 0.0, %v672
        %v674 = vpop.f32.mrf.mxu0
        %675 = vdwg.mxu0
        %676 = vmatprep.subr.mxu0 0.0
        %677 = vmatpush1.msra.mxu0 %v582
        %678 = vmatprep.subr.mxu0 0.0
        %679 = vmatpush1.msra.mxu0 %v581
        %680 = vmatprep.subr.mxu0 0.0
        %681 = vmatpush1.msra.mxu0 %v580
        %682 = vmatprep.subr.mxu0 0.0
        %683 = vmatpush1.msra.mxu0 %v579
        %684 = vmatprep.subr.mxu0 0.0
        %685 = vmatpush1.msra.mxu0 %v578
        %686 = vmatprep.subr.mxu0 0.0
        %687 = vmatpush1.msra.mxu0 %v577
        %688 = vmatprep.subr.mxu0 0.0
        %689 = vmatpush1.msra.mxu0 %v576
        %690 = vmatprep.subr.mxu0 0.0
        %691 = vmatpush1.msra.mxu0 %v575
        %692 = vmatprep.subr.mxu0 0.0
        %693 = vmatpush1.msra.mxu0 %v574
        %694 = vmatprep.subr.mxu0 0.0
        %695 = vmatpush1.msra.mxu0 %v573
        %696 = vmatprep.subr.mxu0 0.0
        %697 = vmatpush1.msra.mxu0 %v572
        %698 = vmatprep.subr.mxu0 0.0
        %699 = vmatpush1.msra.mxu0 %v571
        %700 = vmatprep.subr.mxu0 0.0
        %701 = vmatpush1.msra.mxu0 %v570
        %702 = vmatprep.subr.mxu0 0.0
        %703 = vmatpush1.msra.mxu0 %v569
        %704 = vmatprep.subr.mxu0 0.0
        %705 = vmatpush1.msra.mxu0 %v568
        %706 = vmatprep.subr.mxu0 0.0
        %707 = vmatpush1.msra.mxu0 %v567
        %708 = vmatprep.subr.mxu0 0.0
        %709 = vmatpush2.msra.mxu0 0.0
        %710 = vmatprep.subr.mxu0 0.0
        %711 = vmatpush2.msra.mxu0 0.0
        %712 = vmatprep.subr.mxu0 0.0
        %713 = vmatpush2.msra.mxu0 0.0
        %714 = vmatprep.subr.mxu0 0.0
        %715 = vmatpush2.msra.mxu0 0.0
        %716 = vmatprep.subr.mxu0 0.0
        %717 = vmatpush2.msra.mxu0 0.0
        %718 = vmatprep.subr.mxu0 0.0
        %719 = vmatpush2.msra.mxu0 0.0
        %720 = vmatprep.subr.mxu0 0.0
        %721 = vmatpush2.msra.mxu0 0.0
        %722 = vmatprep.subr.mxu0 0.0
        %723 = vmatpush2.msra.mxu0 0.0
        %724 = vmatprep.subr.mxu0 0.0
        %725 = vmatpush2.msra.mxu0 0.0
        %726 = vmatprep.subr.mxu0 0.0
        %727 = vmatpush2.msra.mxu0 0.0
        %728 = vmatprep.subr.mxu0 0.0
        %729 = vmatpush2.msra.mxu0 0.0
        %730 = vmatprep.subr.mxu0 0.0
        %731 = vmatpush2.msra.mxu0 0.0
        %732 = vmatprep.subr.mxu0 0.0
        %733 = vmatpush2.msra.mxu0 0.0
        %734 = vmatprep.subr.mxu0 0.0
        %735 = vmatpush2.msra.mxu0 0.0
        %736 = vmatprep.subr.mxu0 0.0
        %737 = vmatpush2.msra.mxu0 0.0
        %738 = vmatprep.subr.mxu0 0.0
        %739 = vmatpush2.msra.mxu0 0.0
        %740 = vmatprep.mubr.f32.mxu0 0.0
        %741 = vmatmul.mubr.f32.gmra.mxu0 %v565
        %v742 = vpop.f32.mrf.mxu0
        %v743 = vadd.f32 %v668, %v742
        %v744 = vpop.f32.mrf.mxu0
        %745 = vmatprep.mubr.f32.mxu0 0.0
        %746 = vmatmul.mubr.f32.gmra.mxu0 %v566
        %v747 = vpop.f32.mrf.mxu0
        %v748 = vadd.f32 %v673, %v747
        %v749 = vpop.f32.mrf.mxu0
        %750 = vdwg.mxu0
        %v751 = vld [vmem:[#allocation2 + $0x2] sm:$0xff]
        %v752 = vld [vmem:[#allocation2 + $0xa] sm:$0xff]
        %v753 = vld [vmem:[#allocation6 + $0x100] sm:$0xff]
        %v754 = vld [vmem:[#allocation6 + $0x108] sm:$0xff]
        %v755 = vld [vmem:[#allocation6 + $0x110] sm:$0xff]
        %v756 = vld [vmem:[#allocation6 + $0x118] sm:$0xff]
        %v757 = vld [vmem:[#allocation6 + $0x120] sm:$0xff]
        %v758 = vld [vmem:[#allocation6 + $0x128] sm:$0xff]
        %v759 = vld [vmem:[#allocation6 + $0x130] sm:$0xff]
        %v760 = vld [vmem:[#allocation6 + $0x138] sm:$0xff]
        %v761 = vld [vmem:[#allocation6 + $0x140] sm:$0xff]
        %v762 = vld [vmem:[#allocation6 + $0x148] sm:$0xff]
        %v763 = vld [vmem:[#allocation6 + $0x150] sm:$0xff]
        %v764 = vld [vmem:[#allocation6 + $0x158] sm:$0xff]
        %v765 = vld [vmem:[#allocation6 + $0x160] sm:$0xff]
        %v766 = vld [vmem:[#allocation6 + $0x168] sm:$0xff]
        %v767 = vld [vmem:[#allocation6 + $0x170] sm:$0xff]
        %v768 = vld [vmem:[#allocation6 + $0x178] sm:$0xff]
        %769 = vmatprep.subr.mxu0 0.0
        %770 = vmatpush1.msra.mxu0 %v768
        %771 = vmatprep.subr.mxu0 0.0
        %772 = vmatpush1.msra.mxu0 %v767
        %773 = vmatprep.subr.mxu0 0.0
        %774 = vmatpush1.msra.mxu0 %v766
        %775 = vmatprep.subr.mxu0 0.0
        %776 = vmatpush1.msra.mxu0 %v765
        %777 = vmatprep.subr.mxu0 0.0
        %778 = vmatpush1.msra.mxu0 %v764
        %779 = vmatprep.subr.mxu0 0.0
        %780 = vmatpush1.msra.mxu0 %v763
        %781 = vmatprep.subr.mxu0 0.0
        %782 = vmatpush1.msra.mxu0 %v762
        %783 = vmatprep.subr.mxu0 0.0
        %784 = vmatpush1.msra.mxu0 %v761
        %785 = vmatprep.subr.mxu0 0.0
        %786 = vmatpush1.msra.mxu0 %v760
        %787 = vmatprep.subr.mxu0 0.0
        %788 = vmatpush1.msra.mxu0 %v759
        %789 = vmatprep.subr.mxu0 0.0
        %790 = vmatpush1.msra.mxu0 %v758
        %791 = vmatprep.subr.mxu0 0.0
        %792 = vmatpush1.msra.mxu0 %v757
        %793 = vmatprep.subr.mxu0 0.0
        %794 = vmatpush1.msra.mxu0 %v756
        %795 = vmatprep.subr.mxu0 0.0
        %796 = vmatpush1.msra.mxu0 %v755
        %797 = vmatprep.subr.mxu0 0.0
        %798 = vmatpush1.msra.mxu0 %v754
        %799 = vmatprep.subr.mxu0 0.0
        %800 = vmatpush1.msra.mxu0 %v753
        %801 = vmatprep.subr.mxu0 0.0
        %802 = vmatpush2.msra.mxu0 0.0
        %803 = vmatprep.subr.mxu0 0.0
        %804 = vmatpush2.msra.mxu0 0.0
        %805 = vmatprep.subr.mxu0 0.0
        %806 = vmatpush2.msra.mxu0 0.0
        %807 = vmatprep.subr.mxu0 0.0
        %808 = vmatpush2.msra.mxu0 0.0
        %809 = vmatprep.subr.mxu0 0.0
        %810 = vmatpush2.msra.mxu0 0.0
        %811 = vmatprep.subr.mxu0 0.0
        %812 = vmatpush2.msra.mxu0 0.0
        %813 = vmatprep.subr.mxu0 0.0
        %814 = vmatpush2.msra.mxu0 0.0
        %815 = vmatprep.subr.mxu0 0.0
        %816 = vmatpush2.msra.mxu0 0.0
        %817 = vmatprep.subr.mxu0 0.0
        %818 = vmatpush2.msra.mxu0 0.0
        %819 = vmatprep.subr.mxu0 0.0
        %820 = vmatpush2.msra.mxu0 0.0
        %821 = vmatprep.subr.mxu0 0.0
        %822 = vmatpush2.msra.mxu0 0.0
        %823 = vmatprep.subr.mxu0 0.0
        %824 = vmatpush2.msra.mxu0 0.0
        %825 = vmatprep.subr.mxu0 0.0
        %826 = vmatpush2.msra.mxu0 0.0
        %827 = vmatprep.subr.mxu0 0.0
        %828 = vmatpush2.msra.mxu0 0.0
        %829 = vmatprep.subr.mxu0 0.0
        %830 = vmatpush2.msra.mxu0 0.0
        %831 = vmatprep.subr.mxu0 0.0
        %832 = vmatpush2.msra.mxu0 0.0
        %833 = vmatprep.mubr.f32.mxu0 0.0
        %834 = vmatmul.mubr.f32.gmra.mxu0 %v751
        %v835 = vpop.f32.mrf.mxu0
        %v836 = vadd.f32 0.0, %v835
        %v837 = vpop.f32.mrf.mxu0
        %838 = vmatprep.mubr.f32.mxu0 0.0
        %839 = vmatmul.mubr.f32.gmra.mxu0 %v752
        %v840 = vpop.f32.mrf.mxu0
        %v841 = vadd.f32 0.0, %v840
        %v842 = vpop.f32.mrf.mxu0
        %843 = vdwg.mxu0
        %v844 = vadd.f32 %v743, %v836
        %v845 = vadd.f32 %v748, %v841
        %v846 = vld [vmem:[%s4] sm:$0x1]
        %v848 = vlaneseq
        %v849 = vshrl.u32 %v848, 7
        %v850 = vsub.s32 0, %v849
        %v851 = vrot.slane %v846, %v850
        %v853 = vadd.f32 %v844, %v851
        %v854 = vadd.f32 %v845, %v851
        %855 = vst [vmem:[%s247] sm:$0xff] %v853
        %856 = vst [vmem:[%s247 + $0x8] sm:$0xff] %v854
        %s857 = sand.u32 %s139, 1
        %s858 = scalar_lea.sflag [#allocation5], %s857
        %s859 = sand.u32 %s139, 1
        %s860 = smul.addr %s859, 16
        %s861 = scalar_lea.vmem [#allocation8], %s860
        // Predicated region
        $region49: #{tpu_custom_call.1} parent=39 // pred_check
          %p862 = pneg %p149
        $region50: #{tpu_custom_call.1} parent=39 // pred_check_branch
          %864 = sbr.rel (%p862) target = $region52
        $region51: #{tpu_custom_call.1} parent=39 // pred_region
          %s866 = ssub.s32 256, 256
          %867 = vsyncadd %s858, %s866
          %s868 = smul.addr %s21, 2
          %s869 = smul.addr %s868, 128
          %s870 = scalar_lea.hbm %s5, %s869
          %s871 = sshll.u32 %s861, 4
          %s872 = int_to_ptr.vmem [resolvable:$true] %s871
          %877 = dma.vmem_to_hbm [thread:$0]  %s872, 256, %s870, %s858, 128, 128, 8
        $region52: #{tpu_custom_call.1} parent=39 // pred_fallthru
          _
      $region40: #{tpu_custom_call.1} parent=5 // pred_fallthru
        _
      %p878 = scmp.le.s32.totalorder 2, %s16
      // Predicated region
      $region53: #{tpu_custom_call.1} parent=5 // pred_check
        %p879 = pneg %p878
      $region54: #{tpu_custom_call.1} parent=5 // pred_check_branch
        %881 = sbr.rel (%p879) target = $region56
      $region55: #{tpu_custom_call.1} parent=5 // pred_region
        %s882 = ssub.s32 %s16, 2
        // Predicated region
        $region57: #{tpu_custom_call.1} parent=55 // pred_check
          %p883 = pneg %p155
        $region58: #{tpu_custom_call.1} parent=55 // pred_check_branch
          %885 = sbr.rel (%p883) target = $region60
        $region59: #{tpu_custom_call.1} parent=55 // pred_region
          %s886 = sand.u32 %s140, 1
          %s887 = scalar_lea.sflag [#allocation5], %s886
          %s888 = sand.u32 %s140, 1
          %s889 = smul.addr %s888, 16
          %s890 = scalar_lea.vmem [#allocation8], %s889
          %891 = dma.done %s887, 256
        $region60: #{tpu_custom_call.1} parent=55 // pred_fallthru
          _
      $region56: #{tpu_custom_call.1} parent=5 // pred_fallthru
        _
    $region6: #{tpu_custom_call.1} parent=1 // loop_footer
      %s20 = sadd.s32 1, %s16
    $region7: #{tpu_custom_call.1} parent=1 // loop_footer_branch
      %15 = sbr.rel target = $region3
    $region8: #{tpu_custom_call.1} parent=1 // loop_exit
      _
    %892 = vsyncpa [#allocation4], 1
    %s893 = scalar_lea.sflag [#allocation4], 1
    %894 = vsyncpa %s893, 1
    %895 = vsyncpa [#allocation7], 1
    %896 = vsyncpa [#allocation5], 1
    %s897 = scalar_lea.sflag [#allocation5], 1
    %898 = vsyncpa %s897, 1

</llo_original>
